<compile_context>
chip_gen: v7x
topology: tpu7x:2x2x1
jax: 0.10.0
libtpu: 0.0.40
codegen_flags: <defaults>
</compile_context>

<pallas_src>
import functools

import jax
import jax.numpy as jnp
from jax import lax
from jax.experimental import pallas as pl
from jax.experimental.pallas import tpu as pltpu


LRELU_SLOPE = 0.2
BN_EPS = 1e-5
_VMEM_LIMIT = 48 * 1024 * 1024        # fits v7x (64 MiB phys) and v5e/v6e
_VMEM_TILE_BUDGET = 20 * 1024 * 1024  # double-buffered working-set budget


def _round_up(x, m):
    return (x + m - 1) // m * m


def _pick_tile_m(m_rows, k, coutp, in_bytes):
    # Per-row double-buffered footprint of the heavier pass:
    #   pass 1: 2 x (patch tile [mxu dtype] + conv-out tile [f32])
    #   pass 2: 2 x (y tile + out tile), both f32.
    per_row = max(2 * (k * in_bytes + coutp * 4), 4 * coutp * 4)
    t = max(8, min(1024, _VMEM_TILE_BUDGET // per_row))
    t = (t // 8) * 8
    t = min(t, _round_up(m_rows, 8))
    return max(t, 8)


# ---------------------------------------------------------------------------
# Pass 1: conv (im2col matmul on the MXU) + per-channel sum / sum-of-squares.
# ---------------------------------------------------------------------------
def _conv_stats_kernel(p_ref, w_ref, y_ref, sum_ref, sq_ref):
    i = pl.program_id(0)

    @pl.when(i == 0)
    def _init():
        sum_ref[...] = jnp.zeros_like(sum_ref)
        sq_ref[...] = jnp.zeros_like(sq_ref)

    # (tile_m, K) @ (K, Coutp), f32 accumulation on the MXU.
    y = jnp.dot(p_ref[...], w_ref[...], preferred_element_type=jnp.float32)
    y_ref[...] = y

    # Single pass over the tile: per-channel sum and sum of squares.
    sum_ref[...] += jnp.sum(y, axis=0, keepdims=True)
    sq_ref[...] += jnp.sum(y * y, axis=0, keepdims=True)


# ---------------------------------------------------------------------------
# Pass 2: folded BatchNorm affine (one FMA) + LeakyReLU(0.2).
# ---------------------------------------------------------------------------
def _bn_lrelu_kernel(y_ref, scale_ref, shift_ref, o_ref):
    t = y_ref[...] * scale_ref[...] + shift_ref[...]
    o_ref[...] = jnp.where(t >= 0, t, LRELU_SLOPE * t)


def _im2col_nhwc(x_nhwc, ho, wo):
    """k=4, s=2, p=1 patches, K ordered (kh, kw, c). Returns (M, 16*Cin)."""
    n, _, _, c = x_nhwc.shape
    xp = jnp.pad(x_nhwc, ((0, 0), (1, 1), (1, 1), (0, 0)))
    taps = []
    for kh in range(4):
        for kw in range(4):
            taps.append(xp[:, kh:kh + 2 * ho:2, kw:kw + 2 * wo:2, :])
    patches = jnp.concatenate(taps, axis=-1)          # (N, Ho, Wo, 16*Cin)
    return patches.reshape(n * ho * wo, 16 * c)


@functools.partial(jax.jit, static_argnames=("tile_m", "mxu_dtype"))
def unet_block_down_nhwc(x_nhwc, weight, gamma, beta, *, tile_m=None,
                         mxu_dtype=jnp.bfloat16):
    """NHWC-native path: x_nhwc (N, H, W, Cin) -> (N, Ho, Wo, Cout).

    Chain UNet blocks through this entry point to avoid NCHW round-trips.
    weight is PyTorch Conv2d layout (Cout, Cin, 4, 4); gamma/beta are (Cout,).
    """
    n, h, w, cin = x_nhwc.shape
    cout = weight.shape[0]
    ho, wo = h // 2, w // 2
    m = n * ho * wo
    k = 16 * cin
    coutp = _round_up(max(cout, 128), 128)   # lane-dense output / MXU N dim

    in_bytes = jnp.dtype(mxu_dtype).itemsize
    tm = tile_m if tile_m is not None else _pick_tile_m(m, k, coutp, in_bytes)
    m_pad = _round_up(m, tm)
    n_tiles = m_pad // tm

    # im2col patches; zero-padded rows contribute y == 0, which leaves the
    # sum / sum-of-squares intact (we divide by the true M below).
    patches = _im2col_nhwc(x_nhwc, ho, wo)
    patches = jnp.pad(patches, ((0, m_pad - m), (0, 0))).astype(mxu_dtype)

    # Tiny weight reorder: (Cout, Cin, 4, 4) -> (kh, kw, cin, cout) -> (K, Coutp).
    w_mat = weight.transpose(2, 3, 1, 0).reshape(k, cout)
    w_mat = jnp.pad(w_mat, ((0, 0), (0, coutp - cout))).astype(mxu_dtype)

    grid = (n_tiles,)

    y, ysum, ysq = pl.pallas_call(
        _conv_stats_kernel,
        out_shape=(jax.ShapeDtypeStruct((m_pad, coutp), jnp.float32),
                   jax.ShapeDtypeStruct((1, coutp), jnp.float32),
                   jax.ShapeDtypeStruct((1, coutp), jnp.float32)),
        grid=grid,
        in_specs=[
            pl.BlockSpec((tm, k), lambda i: (i, 0)),
            pl.BlockSpec((k, coutp), lambda i: (0, 0)),
        ],
        out_specs=(
            pl.BlockSpec((tm, coutp), lambda i: (i, 0)),
            pl.BlockSpec((1, coutp), lambda i: (0, 0)),
            pl.BlockSpec((1, coutp), lambda i: (0, 0)),
        ),
        compiler_params=pltpu.CompilerParams(
            dimension_semantics=("arbitrary",),        # sequential stats reduce
            vmem_limit_bytes=_VMEM_LIMIT),
    )(patches, w_mat)

    # Fold training-mode BatchNorm into a single per-channel scale/shift.
    mean = ysum / m
    var = jnp.maximum(ysq / m - mean * mean, 0.0)       # biased var, clamped
    inv = lax.rsqrt(var + BN_EPS)
    gamma_p = jnp.pad(gamma.astype(jnp.float32), (0, coutp - cout)).reshape(1, coutp)
    beta_p = jnp.pad(beta.astype(jnp.float32), (0, coutp - cout)).reshape(1, coutp)
    scale = gamma_p * inv
    shift = beta_p - mean * scale

    out = pl.pallas_call(
        _bn_lrelu_kernel,
        out_shape=jax.ShapeDtypeStruct((m_pad, coutp), jnp.float32),
        grid=grid,
        in_specs=[
            pl.BlockSpec((tm, coutp), lambda i: (i, 0)),
            pl.BlockSpec((1, coutp), lambda i: (0, 0)),
            pl.BlockSpec((1, coutp), lambda i: (0, 0)),
        ],
        out_specs=pl.BlockSpec((tm, coutp), lambda i: (i, 0)),
        input_output_aliases={0: 0},                    # reuse the conv buffer
        compiler_params=pltpu.CompilerParams(
            dimension_semantics=("parallel",),          # both v7x TensorCores
            vmem_limit_bytes=_VMEM_LIMIT),
    )(y, scale, shift)

    return out[:m, :cout].reshape(n, ho, wo, cout)


@functools.partial(jax.jit, static_argnames=("tile_m", "mxu_dtype"))
def unet_block_down(x, weight, gamma, beta, *, tile_m=None,
                    mxu_dtype=jnp.bfloat16):
    """PyTorch-parity entry point: NCHW in, NCHW out."""
    x_nhwc = jnp.transpose(x, (0, 2, 3, 1))
    y = unet_block_down_nhwc(x_nhwc, weight, gamma, beta,
                             tile_m=tile_m, mxu_dtype=mxu_dtype)
    return jnp.transpose(y, (0, 3, 1, 2))


def _reference(x, weight, gamma, beta):
    """Pure-JAX reference matching PyTorch semantics (training-mode BN)."""
    y = lax.conv_general_dilated(
        x, weight, window_strides=(2, 2), padding=((1, 1), (1, 1)),
        dimension_numbers=("NCHW", "OIHW", "NCHW"),
        precision=lax.Precision.HIGHEST)
    mean = y.mean(axis=(0, 2, 3), keepdims=True)
    var = y.var(axis=(0, 2, 3), keepdims=True)     # biased, as BN normalization
    yhat = (y - mean) * lax.rsqrt(var + BN_EPS)
    yhat = yhat * gamma.reshape(1, -1, 1, 1) + beta.reshape(1, -1, 1, 1)
    return jnp.where(yhat >= 0, yhat, LRELU_SLOPE * yhat)


if __name__ == "__main__":
    key = jax.random.PRNGKey(0)
    k_x, k_w = jax.random.split(key)

    N, Cin, Cout, H, W = 2, 4, 8, 16, 16
    x = jax.random.normal(k_x, (N, Cin, H, W), dtype=jnp.float32)
    # PyTorch shapes: Conv2d weight (Cout, Cin, 4, 4); BatchNorm gamma=1, beta=0.
    weight = 0.1 * jax.random.normal(k_w, (Cout, Cin, 4, 4), dtype=jnp.float32)
    gamma = jnp.ones((Cout,), dtype=jnp.float32)
    beta = jnp.zeros((Cout,), dtype=jnp.float32)

    ref = _reference(x, weight, gamma, beta)

    # f32 MXU path with a small tile so the M grid has multiple steps
    # (exercises the tiled two-pass BN accumulation). Tight tolerance.
    out_f32 = jax.block_until_ready(
        unet_block_down(x, weight, gamma, beta, tile_m=64,
                        mxu_dtype=jnp.float32))
    assert out_f32.shape == (N, Cout, H // 2, W // 2), out_f32.shape
    assert jnp.allclose(out_f32, ref, atol=1e-3, rtol=1e-3), float(
        jnp.max(jnp.abs(out_f32 - ref)))

    # Default bf16-input MXU path (native on v6e/v7x); looser tolerance.
    out_bf16 = jax.block_until_ready(unet_block_down(x, weight, gamma, beta))
    assert out_bf16.shape == (N, Cout, H // 2, W // 2), out_bf16.shape
    assert jnp.allclose(out_bf16, ref, atol=5e-2, rtol=5e-2), float(
        jnp.max(jnp.abs(out_bf16 - ref)))

    print("KERNEL_OK")
</pallas_src>

<mosaic_0001>
module attributes {stable_mosaic.version = 11 : i64} {
  func.func @_bn_lrelu_kernel(%arg0: i32, %arg1: memref<64x128xf32, #tpu.memory_space<vmem>>, %arg2: memref<1x128xf32, #tpu.memory_space<vmem>>, %arg3: memref<1x128xf32, #tpu.memory_space<vmem>>, %arg4: memref<64x128xf32, #tpu.memory_space<vmem>>) attributes {dimension_semantics = [#tpu.dimension_semantics<parallel>], iteration_bounds = array<i64: 2>, scalar_prefetch = 0 : i64, scratch_operands = 0 : i64, tpu.core_type = #tpu.core_type<tc>, window_params = [{transform_indices = @transform_0, window_bounds = array<i64: 64, 128>}, {pipeline_mode = #tpu.pipeline_mode<synchronous>, transform_indices = @transform_1, window_bounds = array<i64: 1, 128>}, {pipeline_mode = #tpu.pipeline_mode<synchronous>, transform_indices = @transform_2, window_bounds = array<i64: 1, 128>}, {transform_indices = @transform_3, window_bounds = array<i64: 64, 128>}]} {
    %c0 = arith.constant 0 : index
    %c0_0 = arith.constant 0 : index
    %0 = vector.load %arg1[%c0, %c0_0] : memref<64x128xf32, #tpu.memory_space<vmem>>, vector<64x128xf32>
    %c0_1 = arith.constant 0 : index
    %c0_2 = arith.constant 0 : index
    %1 = vector.load %arg2[%c0_1, %c0_2] : memref<1x128xf32, #tpu.memory_space<vmem>>, vector<1x128xf32>
    %2 = vector.broadcast %1 : vector<1x128xf32> to vector<64x128xf32>
    %3 = arith.mulf %0, %2 : vector<64x128xf32>
    %c0_3 = arith.constant 0 : index
    %c0_4 = arith.constant 0 : index
    %4 = vector.load %arg3[%c0_3, %c0_4] : memref<1x128xf32, #tpu.memory_space<vmem>>, vector<1x128xf32>
    %5 = vector.broadcast %4 : vector<1x128xf32> to vector<64x128xf32>
    %6 = arith.addf %3, %5 : vector<64x128xf32>
    %cst = arith.constant 0.000000e+00 : f32
    %7 = vector.broadcast %cst : f32 to vector<64x128xf32>
    %8 = arith.cmpf oge, %6, %7 : vector<64x128xf32>
    %cst_5 = arith.constant 2.000000e-01 : f32
    %9 = vector.broadcast %cst_5 : f32 to vector<64x128xf32>
    %10 = arith.mulf %9, %6 : vector<64x128xf32>
    %11 = arith.select %8, %6, %10 : vector<64x128xi1>, vector<64x128xf32>
    %c0_6 = arith.constant 0 : index
    %c0_7 = arith.constant 0 : index
    %12 = vector.load %arg4[%c0_6, %c0_7] : memref<64x128xf32, #tpu.memory_space<vmem>>, vector<64x128xf32>
    tpu.vector_store %arg4[%c0_6, %c0_7], %11 {strides = array<i32>} : memref<64x128xf32, #tpu.memory_space<vmem>>, vector<64x128xf32>,
    return
  }
  func.func @transform_0(%arg0: i32) -> (i32, i32) {
    %c0_i32 = arith.constant 0 : i32
    %c0_i32_0 = arith.constant 0 : i32
    return %arg0, %c0_i32 : i32, i32
  }
  func.func @transform_1(%arg0: i32) -> (i32, i32) {
    %c0_i32 = arith.constant 0 : i32
    %c0_i32_0 = arith.constant 0 : i32
    %c0_i32_1 = arith.constant 0 : i32
    return %c0_i32, %c0_i32_0 : i32, i32
  }
  func.func @transform_2(%arg0: i32) -> (i32, i32) {
    %c0_i32 = arith.constant 0 : i32
    %c0_i32_0 = arith.constant 0 : i32
    %c0_i32_1 = arith.constant 0 : i32
    return %c0_i32, %c0_i32_0 : i32, i32
  }
  func.func @transform_3(%arg0: i32) -> (i32, i32) {
    %c0_i32 = arith.constant 0 : i32
    %c0_i32_0 = arith.constant 0 : i32
    return %arg0, %c0_i32 : i32, i32
  }
}

module attributes {stable_mosaic.version = 11 : i64} {
  func.func @_conv_stats_kernel(%arg0: i32, %arg1: memref<64x64xf32, #tpu.memory_space<vmem>>, %arg2: memref<64x128xf32, #tpu.memory_space<vmem>>, %arg3: memref<64x128xf32, #tpu.memory_space<vmem>>, %arg4: memref<1x128xf32, #tpu.memory_space<vmem>>, %arg5: memref<1x128xf32, #tpu.memory_space<vmem>>) attributes {dimension_semantics = [#tpu.dimension_semantics<arbitrary>], iteration_bounds = array<i64: 2>, scalar_prefetch = 0 : i64, scratch_operands = 0 : i64, tpu.core_type = #tpu.core_type<tc>, window_params = [{transform_indices = @transform_0, window_bounds = array<i64: 64, 64>}, {pipeline_mode = #tpu.pipeline_mode<synchronous>, transform_indices = @transform_1, window_bounds = array<i64: 64, 128>}, {transform_indices = @transform_2, window_bounds = array<i64: 64, 128>}, {pipeline_mode = #tpu.pipeline_mode<synchronous>, transform_indices = @transform_3, window_bounds = array<i64: 1, 128>}, {pipeline_mode = #tpu.pipeline_mode<synchronous>, transform_indices = @transform_4, window_bounds = array<i64: 1, 128>}]} {
    %c0_i32 = arith.constant 0 : i32
    %0 = arith.cmpi eq, %arg0, %c0_i32 : i32
    %1 = arith.extui %0 : i1 to i32
    %c0_i32_0 = arith.constant 0 : i32
    %2 = arith.cmpi ne, %1, %c0_i32_0 : i32
    scf.if %2 {
      %cst_16 = arith.constant 0.000000e+00 : f32
      %18 = vector.broadcast %cst_16 : f32 to vector<1x128xf32>
      %c0_17 = arith.constant 0 : index
      %c0_18 = arith.constant 0 : index
      %19 = vector.load %arg4[%c0_17, %c0_18] : memref<1x128xf32, #tpu.memory_space<vmem>>, vector<1x128xf32>
      tpu.vector_store %arg4[%c0_17, %c0_18], %18 {strides = array<i32>} : memref<1x128xf32, #tpu.memory_space<vmem>>, vector<1x128xf32>,
      %cst_19 = arith.constant 0.000000e+00 : f32
      %20 = vector.broadcast %cst_19 : f32 to vector<1x128xf32>
      %c0_20 = arith.constant 0 : index
      %c0_21 = arith.constant 0 : index
      %21 = vector.load %arg5[%c0_20, %c0_21] : memref<1x128xf32, #tpu.memory_space<vmem>>, vector<1x128xf32>
      tpu.vector_store %arg5[%c0_20, %c0_21], %20 {strides = array<i32>} : memref<1x128xf32, #tpu.memory_space<vmem>>, vector<1x128xf32>,
    } else {
    }
    %c0 = arith.constant 0 : index
    %c0_1 = arith.constant 0 : index
    %3 = vector.load %arg1[%c0, %c0_1] : memref<64x64xf32, #tpu.memory_space<vmem>>, vector<64x64xf32>
    %c0_2 = arith.constant 0 : index
    %c0_3 = arith.constant 0 : index
    %4 = vector.load %arg2[%c0_2, %c0_3] : memref<64x128xf32, #tpu.memory_space<vmem>>, vector<64x128xf32>
    %cst = arith.constant dense<0.000000e+00> : vector<64x128xf32>
    %5 = tpu.matmul %3, %4, %cst {dimension_numbers = #tpu.dot_dimension_numbers<[1], [0], [0], [1], [0, 0, 1, 1], [], []>} : vector<64x64xf32>, vector<64x128xf32>, vector<64x128xf32> -> vector<64x128xf32>
    %c0_4 = arith.constant 0 : index
    %c0_5 = arith.constant 0 : index
    %6 = vector.load %arg3[%c0_4, %c0_5] : memref<64x128xf32, #tpu.memory_space<vmem>>, vector<64x128xf32>
    tpu.vector_store %arg3[%c0_4, %c0_5], %5 {strides = array<i32>} : memref<64x128xf32, #tpu.memory_space<vmem>>, vector<64x128xf32>,
    %c0_6 = arith.constant 0 : index
    %c0_7 = arith.constant 0 : index
    %7 = vector.load %arg4[%c0_6, %c0_7] : memref<1x128xf32, #tpu.memory_space<vmem>>, vector<1x128xf32>
    %cst_8 = arith.constant dense<0.000000e+00> : vector<128xf32>
    %8 = vector.multi_reduction <add>, %5, %cst_8 [0] : vector<64x128xf32> to vector<128xf32>
    %9 = vector.shape_cast %8 : vector<128xf32> to vector<1x128xf32>
    %10 = arith.addf %7, %9 : vector<1x128xf32>
    %c0_9 = arith.constant 0 : index
    %c0_10 = arith.constant 0 : index
    %11 = vector.load %arg4[%c0_9, %c0_10] : memref<1x128xf32, #tpu.memory_space<vmem>>, vector<1x128xf32>
    tpu.vector_store %arg4[%c0_9, %c0_10], %10 {strides = array<i32>} : memref<1x128xf32, #tpu.memory_space<vmem>>, vector<1x128xf32>,
    %c0_11 = arith.constant 0 : index
    %c0_12 = arith.constant 0 : index
    %12 = vector.load %arg5[%c0_11, %c0_12] : memref<1x128xf32, #tpu.memory_space<vmem>>, vector<1x128xf32>
    %13 = arith.mulf %5, %5 : vector<64x128xf32>
    %cst_13 = arith.constant dense<0.000000e+00> : vector<128xf32>
    %14 = vector.multi_reduction <add>, %13, %cst_13 [0] : vector<64x128xf32> to vector<128xf32>
    %15 = vector.shape_cast %14 : vector<128xf32> to vector<1x128xf32>
    %16 = arith.addf %12, %15 : vector<1x128xf32>
    %c0_14 = arith.constant 0 : index
    %c0_15 = arith.constant 0 : index
    %17 = vector.load %arg5[%c0_14, %c0_15] : memref<1x128xf32, #tpu.memory_space<vmem>>, vector<1x128xf32>
    tpu.vector_store %arg5[%c0_14, %c0_15], %16 {strides = array<i32>} : memref<1x128xf32, #tpu.memory_space<vmem>>, vector<1x128xf32>,
    return
  }
  func.func @transform_0(%arg0: i32) -> (i32, i32) {
    %c0_i32 = arith.constant 0 : i32
    %c0_i32_0 = arith.constant 0 : i32
    return %arg0, %c0_i32 : i32, i32
  }
  func.func @transform_1(%arg0: i32) -> (i32, i32) {
    %c0_i32 = arith.constant 0 : i32
    %c0_i32_0 = arith.constant 0 : i32
    %c0_i32_1 = arith.constant 0 : i32
    return %c0_i32, %c0_i32_0 : i32, i32
  }
  func.func @transform_2(%arg0: i32) -> (i32, i32) {
    %c0_i32 = arith.constant 0 : i32
    %c0_i32_0 = arith.constant 0 : i32
    return %arg0, %c0_i32 : i32, i32
  }
  func.func @transform_3(%arg0: i32) -> (i32, i32) {
    %c0_i32 = arith.constant 0 : i32
    %c0_i32_0 = arith.constant 0 : i32
    %c0_i32_1 = arith.constant 0 : i32
    return %c0_i32, %c0_i32_0 : i32, i32
  }
  func.func @transform_4(%arg0: i32) -> (i32, i32) {
    %c0_i32 = arith.constant 0 : i32
    %c0_i32_0 = arith.constant 0 : i32
    %c0_i32_1 = arith.constant 0 : i32
    return %c0_i32, %c0_i32_0 : i32, i32
  }
}

</mosaic_0001>

<llo_original>
// kernel: unet_block_down_nhwc.3
$region0: #{unet_block_down_nhwc.3}
  #allocation0 [shape = 'u32[]', space=smem, size = 0x4, offset = 0x4, fixed_abs, tag = 'smem constant byte address 0x4 - core index']
  #allocation1 [shape = 'u32[144,128]{1,0:T(1,128)}', space=vmem, size = 0x12000, scoped, tag = 'internal scratch']
  %s0 = inlined_call_operand.vmem [shape: f32[128,128], index: 0, kind: input, shape index: {}, may-alias: {0,3}]
  %s1 = inlined_call_operand.vmem [shape: f32[1,128], index: 1, kind: input, shape index: {}]
  %s2 = inlined_call_operand.vmem [shape: f32[1,128], index: 2, kind: input, shape index: {}]
  %s3 = inlined_call_operand.vmem [shape: f32[128,128], index: 3, kind: output, shape index: {}, may-alias: {0,3}]
  %s4 = sld [smem:[#allocation0]]
  $region45: #{unet_block_down_nhwc.3} parent=0
    _
  %s6 = ssub.s32 1, %s4
  %s7 = scalar_select 0, %s6, %s4
  loop: start=0, step=1, limit=4
  $region2: #{unet_block_down_nhwc.3} parent=0 // loop_pre_header
    _
  $region3: #{unet_block_down_nhwc.3} parent=0 // loop_header
    %s9 = sphi 0, %s13
    %p10 = scmp.ge.s32.totalorder %s9, 4
    %s19 = sphi 0, %s21
    %s22 = sphi 0, %s19
    %s23 = sphi 0, %s22
    %s39 = sphi 0, %s23
    %s43 = sphi 0, %s43
    %s45 = sphi 0, %s43
    %s46 = sphi 0, %s45
    %s60 = sphi 0, %s46
    %s64 = sphi 0, %s64
    %s66 = sphi 0, %s64
    %s67 = sphi 0, %s66
    %s81 = sphi 0, %s67
    %s87 = sphi 0, %s89
    %s90 = sphi 0, %s87
    %s91 = sphi 0, %s90
    %s107 = sphi 0, %s91
  $region4: #{unet_block_down_nhwc.3} parent=0 // loop_header_branch
    %12 = sbr.rel (%p10) target = $region8
  $region5: #{unet_block_down_nhwc.3} parent=0 // loop_body
    %s14 = ssub.s32 %s9, 1
    %s15 = ssub.s32 %s9, 2
    %s16 = sadd.s32 %s9, 1
    %s17 = ssub.s32 %s9, %s16
    %p18 = scmp.eq.s32.totalorder %s17, 0
    %s20 = sadd.s32 %s19, 1
    %s21 = scalar_select %p18, %s19, %s20
    %p24 = pneg %p18
    %p25 = scmp.eq.s32.totalorder %s9, 1
    %p26 = por %p24, %p25
    %p27 = scmp.ne.s32.totalorder %s19, %s22
    %p28 = scmp.eq.s32.totalorder %s9, 0
    %p29 = por %p27, %p28
    %p30 = scmp.ne.s32.totalorder %s19, %s22
    %p31 = scmp.eq.s32.totalorder %s14, 1
    %p32 = por %p30, %p31
    %p33 = scmp.ne.s32.totalorder %s22, %s23
    %p34 = scmp.eq.s32.totalorder %s14, 0
    %p35 = por %p33, %p34
    %p36 = scmp.ne.s32.totalorder %s22, %s23
    %p37 = scmp.eq.s32.totalorder %s15, 1
    %p38 = por %p36, %p37
    %p40 = scmp.ne.s32.totalorder %s23, %s39
    %p41 = scmp.eq.s32.totalorder %s15, 0
    %p42 = por %p40, %p41
    %s44 = sadd.s32 %s43, 1
    %p47 = scmp.eq.s32.totalorder %s9, 1
    %p48 = scmp.ne.s32.totalorder %s43, %s45
    %p49 = scmp.eq.s32.totalorder %s9, 0
    %p50 = por %p48, %p49
    %p51 = scmp.ne.s32.totalorder %s43, %s45
    %p52 = scmp.eq.s32.totalorder %s14, 1
    %p53 = por %p51, %p52
    %p54 = scmp.ne.s32.totalorder %s45, %s46
    %p55 = scmp.eq.s32.totalorder %s14, 0
    %p56 = por %p54, %p55
    %p57 = scmp.ne.s32.totalorder %s45, %s46
    %p58 = scmp.eq.s32.totalorder %s15, 1
    %p59 = por %p57, %p58
    %p61 = scmp.ne.s32.totalorder %s46, %s60
    %p62 = scmp.eq.s32.totalorder %s15, 0
    %p63 = por %p61, %p62
    %s65 = sadd.s32 %s64, 1
    %p68 = scmp.eq.s32.totalorder %s9, 1
    %p69 = scmp.ne.s32.totalorder %s64, %s66
    %p70 = scmp.eq.s32.totalorder %s9, 0
    %p71 = por %p69, %p70
    %p72 = scmp.ne.s32.totalorder %s64, %s66
    %p73 = scmp.eq.s32.totalorder %s14, 1
    %p74 = por %p72, %p73
    %p75 = scmp.ne.s32.totalorder %s66, %s67
    %p76 = scmp.eq.s32.totalorder %s14, 0
    %p77 = por %p75, %p76
    %p78 = scmp.ne.s32.totalorder %s66, %s67
    %p79 = scmp.eq.s32.totalorder %s15, 1
    %p80 = por %p78, %p79
    %p82 = scmp.ne.s32.totalorder %s67, %s81
    %p83 = scmp.eq.s32.totalorder %s15, 0
    %p84 = por %p82, %p83
    %s85 = ssub.s32 %s9, %s16
    %p86 = scmp.eq.s32.totalorder %s85, 0
    %s88 = sadd.s32 %s87, 1
    %s89 = scalar_select %p86, %s87, %s88
    %p92 = pneg %p86
    %p93 = scmp.eq.s32.totalorder %s9, 1
    %p94 = por %p92, %p93
    %p95 = scmp.ne.s32.totalorder %s87, %s90
    %p96 = scmp.eq.s32.totalorder %s9, 0
    %p97 = por %p95, %p96
    %p98 = scmp.ne.s32.totalorder %s87, %s90
    %p99 = scmp.eq.s32.totalorder %s14, 1
    %p100 = por %p98, %p99
    %p101 = scmp.ne.s32.totalorder %s90, %s91
    %p102 = scmp.eq.s32.totalorder %s14, 0
    %p103 = por %p101, %p102
    %p104 = scmp.ne.s32.totalorder %s90, %s91
    %p105 = scmp.eq.s32.totalorder %s15, 1
    %p106 = por %p104, %p105
    %p108 = scmp.ne.s32.totalorder %s91, %s107
    %p109 = scmp.eq.s32.totalorder %s15, 0
    %p110 = por %p108, %p109
    %p111 = scmp.le.s32.totalorder 1, %s9
    %p112 = scmp.lt.s32.totalorder %s9, 3
    %p113 = pnand %p111, %p112
    %p114 = pneg %p113
    // Predicated region
    $region9: #{unet_block_down_nhwc.3} parent=5 // pred_check
      _
    $region10: #{unet_block_down_nhwc.3} parent=5 // pred_check_branch
      %116 = sbr.rel (%p113) target = $region12
    $region11: #{unet_block_down_nhwc.3} parent=5 // pred_region
      %s117 = ssub.s32 %s9, 1
      // Predicated region
      $region13: #{unet_block_down_nhwc.3} parent=11 // pred_check
        %p118 = pneg %p56
      $region14: #{unet_block_down_nhwc.3} parent=11 // pred_check_branch
        %120 = sbr.rel (%p118) target = $region16
      $region15: #{unet_block_down_nhwc.3} parent=11 // pred_region
        _
      $region16: #{unet_block_down_nhwc.3} parent=11 // pred_fallthru
        _
      // Predicated region
      $region17: #{unet_block_down_nhwc.3} parent=11 // pred_check
        %p121 = pneg %p77
      $region18: #{unet_block_down_nhwc.3} parent=11 // pred_check_branch
        %123 = sbr.rel (%p121) target = $region20
      $region19: #{unet_block_down_nhwc.3} parent=11 // pred_region
        _
      $region20: #{unet_block_down_nhwc.3} parent=11 // pred_fallthru
        _
    $region12: #{unet_block_down_nhwc.3} parent=5 // pred_fallthru
      _
    %p124 = scmp.lt.s32.totalorder %s9, 2
    // Predicated region
    $region21: #{unet_block_down_nhwc.3} parent=5 // pred_check
      %p125 = pneg %p124
    $region22: #{unet_block_down_nhwc.3} parent=5 // pred_check_branch
      %127 = sbr.rel (%p125) target = $region24
    $region23: #{unet_block_down_nhwc.3} parent=5 // pred_region
      // Predicated region
      $region25: #{unet_block_down_nhwc.3} parent=23 // pred_check
        %p128 = pneg %p29
      $region26: #{unet_block_down_nhwc.3} parent=23 // pred_check_branch
        %130 = sbr.rel (%p128) target = $region28
      $region27: #{unet_block_down_nhwc.3} parent=23 // pred_region
        %s131 = smul.u32 8, %s9
        %p132 = scmp.lt.s32.totalorder %s131, 15
        %s133 = scalar_select %p132, %s131, 15
        %s134 = smul.addr %s133, 8
        %s135 = scalar_lea.vmem %s0, %s134
        %s136 = smul.u32 8, %s9
      $region28: #{unet_block_down_nhwc.3} parent=23 // pred_fallthru
        _
    $region24: #{unet_block_down_nhwc.3} parent=5 // pred_fallthru
      _
    %p137 = scmp.le.s32.totalorder 1, %s9
    %p138 = scmp.lt.s32.totalorder %s9, 3
    %p139 = pnand %p137, %p138
    %p140 = pneg %p139
    // Predicated region
    $region29: #{unet_block_down_nhwc.3} parent=5 // pred_check
      _
    $region30: #{unet_block_down_nhwc.3} parent=5 // pred_check_branch
      %142 = sbr.rel (%p139) target = $region32
    $region31: #{unet_block_down_nhwc.3} parent=5 // pred_region
      %s143 = ssub.s32 %s9, 1
      %s144 = smul.u32 8, %s14
      %p145 = scmp.lt.s32.totalorder %s144, 15
      %s146 = scalar_select %p145, %s144, 15
      %s147 = smul.addr %s146, 8
      %s148 = scalar_lea.vmem %s0, %s147
      %p149 = pneg %p35
      %p150 = pneg %p32
      %p151 = pneg %p56
      %p152 = pneg %p53
      %p153 = pneg %p77
      %p154 = pneg %p74
      %p155 = pneg %p103
      %p156 = pneg %p100
      %s157 = smul.u32 8, %s14
      %p158 = scmp.lt.s32.totalorder %s157, 15
      %s159 = scalar_select %p158, %s157, 15
      %s160 = smul.addr %s159, 8
      %s161 = scalar_lea.vmem %s3, %s160
      %s162 = smul.u32 8, %s14
      %p163 = scmp.lt.s32.totalorder %s162, 15
      %s164 = scalar_select %p163, %s162, 15
      %s165 = smul.addr %s164, 8
      %s166 = scalar_lea.vmem %s0, %s165
      %s167 = smul.u32 8, %s14
      %s168 = smul.u32 8, %s14
      %p169 = scmp.lt.s32.totalorder %s168, 15
      %s170 = scalar_select %p169, %s168, 15
      %s171 = smul.addr %s170, 8
      %s172 = scalar_lea.vmem %s3, %s171
      %s173 = smul.u32 8, %s14
      %v174 = vld [vmem:[%s166] sm:$0xff]
      %v175 = vld [vmem:[%s166 + $0x8] sm:$0xff]
      %v176 = vld [vmem:[%s166 + $0x10] sm:$0xff]
      %v177 = vld [vmem:[%s166 + $0x18] sm:$0xff]
      %v178 = vld [vmem:[%s166 + $0x20] sm:$0xff]
      %v179 = vld [vmem:[%s166 + $0x28] sm:$0xff]
      %v180 = vld [vmem:[%s166 + $0x30] sm:$0xff]
      %v181 = vld [vmem:[%s166 + $0x38] sm:$0xff]
      %v182 = vld [vmem:[%s1] sm:$0x1]
      %v184 = vlaneseq
      %v185 = vshrl.u32 %v184, 7
      %v186 = vsub.s32 0, %v185
      %v187 = vrot.slane %v182, %v186
      %v189 = vmul.f32 %v174, %v187
      %v190 = vmul.f32 %v175, %v187
      %v191 = vmul.f32 %v176, %v187
      %v192 = vmul.f32 %v177, %v187
      %v193 = vmul.f32 %v178, %v187
      %v194 = vmul.f32 %v179, %v187
      %v195 = vmul.f32 %v180, %v187
      %v196 = vmul.f32 %v181, %v187
      %v197 = vld [vmem:[%s2] sm:$0x1]
      %v199 = vlaneseq
      %v200 = vshrl.u32 %v199, 7
      %v201 = vsub.s32 0, %v200
      %v202 = vrot.slane %v197, %v201
      %v204 = vadd.f32 %v189, %v202
      %v205 = vadd.f32 %v190, %v202
      %v206 = vadd.f32 %v191, %v202
      %v207 = vadd.f32 %v192, %v202
      %v208 = vadd.f32 %v193, %v202
      %v209 = vadd.f32 %v194, %v202
      %v210 = vadd.f32 %v195, %v202
      %v211 = vadd.f32 %v196, %v202
      %vm212 = vcmp.ge.f32.partialorder %v204, 0.0
      %vm213 = vcmp.ge.f32.partialorder %v205, 0.0
      %vm214 = vcmp.ge.f32.partialorder %v206, 0.0
      %vm215 = vcmp.ge.f32.partialorder %v207, 0.0
      %vm216 = vcmp.ge.f32.partialorder %v208, 0.0
      %vm217 = vcmp.ge.f32.partialorder %v209, 0.0
      %vm218 = vcmp.ge.f32.partialorder %v210, 0.0
      %vm219 = vcmp.ge.f32.partialorder %v211, 0.0
      %v220 = vmul.f32 %v204, 0.2
      %v221 = vmul.f32 %v205, 0.2
      %v222 = vmul.f32 %v206, 0.2
      %v223 = vmul.f32 %v207, 0.2
      %v224 = vmul.f32 %v208, 0.2
      %v225 = vmul.f32 %v209, 0.2
      %v226 = vmul.f32 %v210, 0.2
      %v227 = vmul.f32 %v211, 0.2
      %v228 = vsel %vm212, %v204, %v220
      %v229 = vsel %vm213, %v205, %v221
      %v230 = vsel %vm214, %v206, %v222
      %v231 = vsel %vm215, %v207, %v223
      %v232 = vsel %vm216, %v208, %v224
      %v233 = vsel %vm217, %v209, %v225
      %v234 = vsel %vm218, %v210, %v226
      %v235 = vsel %vm219, %v211, %v227
      %236 = vst [vmem:[%s172] sm:$0xff] %v228
      %237 = vst [vmem:[%s172 + $0x8] sm:$0xff] %v229
      %238 = vst [vmem:[%s172 + $0x10] sm:$0xff] %v230
      %239 = vst [vmem:[%s172 + $0x18] sm:$0xff] %v231
      %240 = vst [vmem:[%s172 + $0x20] sm:$0xff] %v232
      %241 = vst [vmem:[%s172 + $0x28] sm:$0xff] %v233
      %242 = vst [vmem:[%s172 + $0x30] sm:$0xff] %v234
      %243 = vst [vmem:[%s172 + $0x38] sm:$0xff] %v235
      %s244 = smul.u32 8, %s14
      %p245 = scmp.lt.s32.totalorder %s244, 15
      %s246 = scalar_select %p245, %s244, 15
      %s247 = smul.addr %s246, 8
      %s248 = scalar_lea.vmem %s3, %s247
      // Predicated region
      $region33: #{unet_block_down_nhwc.3} parent=31 // pred_check
        %p249 = pneg %p100
      $region34: #{unet_block_down_nhwc.3} parent=31 // pred_check_branch
        %251 = sbr.rel (%p249) target = $region36
      $region35: #{unet_block_down_nhwc.3} parent=31 // pred_region
        %s252 = smul.u32 8, %s14
      $region36: #{unet_block_down_nhwc.3} parent=31 // pred_fallthru
        _
    $region32: #{unet_block_down_nhwc.3} parent=5 // pred_fallthru
      _
    %p253 = scmp.le.s32.totalorder 2, %s9
    // Predicated region
    $region37: #{unet_block_down_nhwc.3} parent=5 // pred_check
      %p254 = pneg %p253
    $region38: #{unet_block_down_nhwc.3} parent=5 // pred_check_branch
      %256 = sbr.rel (%p254) target = $region40
    $region39: #{unet_block_down_nhwc.3} parent=5 // pred_region
      %s257 = ssub.s32 %s9, 2
      // Predicated region
      $region41: #{unet_block_down_nhwc.3} parent=39 // pred_check
        %p258 = pneg %p106
      $region42: #{unet_block_down_nhwc.3} parent=39 // pred_check_branch
        %260 = sbr.rel (%p258) target = $region44
      $region43: #{unet_block_down_nhwc.3} parent=39 // pred_region
        %s261 = smul.u32 8, %s15
        %p262 = scmp.lt.s32.totalorder %s261, 15
        %s263 = scalar_select %p262, %s261, 15
        %s264 = smul.addr %s263, 8
        %s265 = scalar_lea.vmem %s3, %s264
      $region44: #{unet_block_down_nhwc.3} parent=39 // pred_fallthru
        _
    $region40: #{unet_block_down_nhwc.3} parent=5 // pred_fallthru
      _
  $region6: #{unet_block_down_nhwc.3} parent=0 // loop_footer
    %s13 = sadd.s32 1, %s9
  $region7: #{unet_block_down_nhwc.3} parent=0 // loop_footer_branch
    %8 = sbr.rel target = $region3
  $region8: #{unet_block_down_nhwc.3} parent=0 // loop_exit
    _

// kernel: unet_block_down_nhwc.2
$region0: #{unet_block_down_nhwc.2}
  #allocation0 [shape = 'u32[]', space=smem, size = 0x4, offset = 0x4, fixed_abs, tag = 'smem constant byte address 0x4 - core index']
  #allocation1 [shape = 'u32[144,128]{1,0:T(1,128)}', space=vmem, size = 0x12000, scoped, tag = 'internal scratch']
  %s0 = inlined_call_operand.vmem [shape: f32[128,64], index: 0, kind: input, shape index: {}]
  %s1 = inlined_call_operand.vmem [shape: f32[64,128], index: 1, kind: input, shape index: {}]
  %s2 = inlined_call_operand.vmem [shape: f32[128,128], index: 2, kind: output, shape index: {0}]
  %s3 = inlined_call_operand.vmem [shape: f32[1,128], index: 3, kind: output, shape index: {1}]
  %s4 = inlined_call_operand.vmem [shape: f32[1,128], index: 4, kind: output, shape index: {2}]
  %5 = xla_tuple %s2, %s3, %s4
  %s6 = sld [smem:[#allocation0]]
  $region61: #{unet_block_down_nhwc.2} parent=0
    _
  %s8 = ssub.s32 1, %s6
  %s9 = scalar_select 0, %s8, %s6
  loop: start=0, step=1, limit=4
  $region2: #{unet_block_down_nhwc.2} parent=0 // loop_pre_header
    _
  $region3: #{unet_block_down_nhwc.2} parent=0 // loop_header
    %s11 = sphi 0, %s15
    %p12 = scmp.ge.s32.totalorder %s11, 4
    %s21 = sphi 0, %s23
    %s24 = sphi 0, %s21
    %s25 = sphi 0, %s24
    %s41 = sphi 0, %s25
    %s45 = sphi 0, %s45
    %s47 = sphi 0, %s45
    %s48 = sphi 0, %s47
    %s62 = sphi 0, %s48
    %s68 = sphi 0, %s70
    %s71 = sphi 0, %s68
    %s72 = sphi 0, %s71
    %s88 = sphi 0, %s72
    %s92 = sphi 0, %s92
    %s94 = sphi 0, %s92
    %s95 = sphi 0, %s94
    %s109 = sphi 0, %s95
    %s113 = sphi 0, %s113
    %s115 = sphi 0, %s113
    %s116 = sphi 0, %s115
    %s130 = sphi 0, %s116
  $region4: #{unet_block_down_nhwc.2} parent=0 // loop_header_branch
    %14 = sbr.rel (%p12) target = $region8
  $region5: #{unet_block_down_nhwc.2} parent=0 // loop_body
    %s16 = ssub.s32 %s11, 1
    %s17 = ssub.s32 %s11, 2
    %s18 = sadd.s32 %s11, 1
    %s19 = ssub.s32 %s11, %s18
    %p20 = scmp.eq.s32.totalorder %s19, 0
    %s22 = sadd.s32 %s21, 1
    %s23 = scalar_select %p20, %s21, %s22
    %p26 = pneg %p20
    %p27 = scmp.eq.s32.totalorder %s11, 1
    %p28 = por %p26, %p27
    %p29 = scmp.ne.s32.totalorder %s21, %s24
    %p30 = scmp.eq.s32.totalorder %s11, 0
    %p31 = por %p29, %p30
    %p32 = scmp.ne.s32.totalorder %s21, %s24
    %p33 = scmp.eq.s32.totalorder %s16, 1
    %p34 = por %p32, %p33
    %p35 = scmp.ne.s32.totalorder %s24, %s25
    %p36 = scmp.eq.s32.totalorder %s16, 0
    %p37 = por %p35, %p36
    %p38 = scmp.ne.s32.totalorder %s24, %s25
    %p39 = scmp.eq.s32.totalorder %s17, 1
    %p40 = por %p38, %p39
    %p42 = scmp.ne.s32.totalorder %s25, %s41
    %p43 = scmp.eq.s32.totalorder %s17, 0
    %p44 = por %p42, %p43
    %s46 = sadd.s32 %s45, 1
    %p49 = scmp.eq.s32.totalorder %s11, 1
    %p50 = scmp.ne.s32.totalorder %s45, %s47
    %p51 = scmp.eq.s32.totalorder %s11, 0
    %p52 = por %p50, %p51
    %p53 = scmp.ne.s32.totalorder %s45, %s47
    %p54 = scmp.eq.s32.totalorder %s16, 1
    %p55 = por %p53, %p54
    %p56 = scmp.ne.s32.totalorder %s47, %s48
    %p57 = scmp.eq.s32.totalorder %s16, 0
    %p58 = por %p56, %p57
    %p59 = scmp.ne.s32.totalorder %s47, %s48
    %p60 = scmp.eq.s32.totalorder %s17, 1
    %p61 = por %p59, %p60
    %p63 = scmp.ne.s32.totalorder %s48, %s62
    %p64 = scmp.eq.s32.totalorder %s17, 0
    %p65 = por %p63, %p64
    %s66 = ssub.s32 %s11, %s18
    %p67 = scmp.eq.s32.totalorder %s66, 0
    %s69 = sadd.s32 %s68, 1
    %s70 = scalar_select %p67, %s68, %s69
    %p73 = pneg %p67
    %p74 = scmp.eq.s32.totalorder %s11, 1
    %p75 = por %p73, %p74
    %p76 = scmp.ne.s32.totalorder %s68, %s71
    %p77 = scmp.eq.s32.totalorder %s11, 0
    %p78 = por %p76, %p77
    %p79 = scmp.ne.s32.totalorder %s68, %s71
    %p80 = scmp.eq.s32.totalorder %s16, 1
    %p81 = por %p79, %p80
    %p82 = scmp.ne.s32.totalorder %s71, %s72
    %p83 = scmp.eq.s32.totalorder %s16, 0
    %p84 = por %p82, %p83
    %p85 = scmp.ne.s32.totalorder %s71, %s72
    %p86 = scmp.eq.s32.totalorder %s17, 1
    %p87 = por %p85, %p86
    %p89 = scmp.ne.s32.totalorder %s72, %s88
    %p90 = scmp.eq.s32.totalorder %s17, 0
    %p91 = por %p89, %p90
    %s93 = sadd.s32 %s92, 1
    %p96 = scmp.eq.s32.totalorder %s11, 1
    %p97 = scmp.ne.s32.totalorder %s92, %s94
    %p98 = scmp.eq.s32.totalorder %s11, 0
    %p99 = por %p97, %p98
    %p100 = scmp.ne.s32.totalorder %s92, %s94
    %p101 = scmp.eq.s32.totalorder %s16, 1
    %p102 = por %p100, %p101
    %p103 = scmp.ne.s32.totalorder %s94, %s95
    %p104 = scmp.eq.s32.totalorder %s16, 0
    %p105 = por %p103, %p104
    %p106 = scmp.ne.s32.totalorder %s94, %s95
    %p107 = scmp.eq.s32.totalorder %s17, 1
    %p108 = por %p106, %p107
    %p110 = scmp.ne.s32.totalorder %s95, %s109
    %p111 = scmp.eq.s32.totalorder %s17, 0
    %p112 = por %p110, %p111
    %s114 = sadd.s32 %s113, 1
    %p117 = scmp.eq.s32.totalorder %s11, 1
    %p118 = scmp.ne.s32.totalorder %s113, %s115
    %p119 = scmp.eq.s32.totalorder %s11, 0
    %p120 = por %p118, %p119
    %p121 = scmp.ne.s32.totalorder %s113, %s115
    %p122 = scmp.eq.s32.totalorder %s16, 1
    %p123 = por %p121, %p122
    %p124 = scmp.ne.s32.totalorder %s115, %s116
    %p125 = scmp.eq.s32.totalorder %s16, 0
    %p126 = por %p124, %p125
    %p127 = scmp.ne.s32.totalorder %s115, %s116
    %p128 = scmp.eq.s32.totalorder %s17, 1
    %p129 = por %p127, %p128
    %p131 = scmp.ne.s32.totalorder %s116, %s130
    %p132 = scmp.eq.s32.totalorder %s17, 0
    %p133 = por %p131, %p132
    %p134 = scmp.le.s32.totalorder 1, %s11
    %p135 = scmp.lt.s32.totalorder %s11, 3
    %p136 = pnand %p134, %p135
    %p137 = pneg %p136
    // Predicated region
    $region9: #{unet_block_down_nhwc.2} parent=5 // pred_check
      _
    $region10: #{unet_block_down_nhwc.2} parent=5 // pred_check_branch
      %139 = sbr.rel (%p136) target = $region12
    $region11: #{unet_block_down_nhwc.2} parent=5 // pred_region
      %s140 = ssub.s32 %s11, 1
      // Predicated region
      $region13: #{unet_block_down_nhwc.2} parent=11 // pred_check
        %p141 = pneg %p58
      $region14: #{unet_block_down_nhwc.2} parent=11 // pred_check_branch
        %143 = sbr.rel (%p141) target = $region16
      $region15: #{unet_block_down_nhwc.2} parent=11 // pred_region
        _
      $region16: #{unet_block_down_nhwc.2} parent=11 // pred_fallthru
        _
    $region12: #{unet_block_down_nhwc.2} parent=5 // pred_fallthru
      _
    %p144 = scmp.lt.s32.totalorder %s11, 2
    // Predicated region
    $region17: #{unet_block_down_nhwc.2} parent=5 // pred_check
      %p145 = pneg %p144
    $region18: #{unet_block_down_nhwc.2} parent=5 // pred_check_branch
      %147 = sbr.rel (%p145) target = $region20
    $region19: #{unet_block_down_nhwc.2} parent=5 // pred_region
      // Predicated region
      $region21: #{unet_block_down_nhwc.2} parent=19 // pred_check
        %p148 = pneg %p31
      $region22: #{unet_block_down_nhwc.2} parent=19 // pred_check_branch
        %150 = sbr.rel (%p148) target = $region24
      $region23: #{unet_block_down_nhwc.2} parent=19 // pred_region
        %s151 = smul.u32 8, %s11
        %p152 = scmp.lt.s32.totalorder %s151, 15
        %s153 = scalar_select %p152, %s151, 15
        %s154 = smul.addr %s153, 8
        %s155 = scalar_lea.vmem %s0, %s154
        %s156 = smul.u32 8, %s11
      $region24: #{unet_block_down_nhwc.2} parent=19 // pred_fallthru
        _
    $region20: #{unet_block_down_nhwc.2} parent=5 // pred_fallthru
      _
    %p157 = scmp.le.s32.totalorder 1, %s11
    %p158 = scmp.lt.s32.totalorder %s11, 3
    %p159 = pnand %p157, %p158
    %p160 = pneg %p159
    // Predicated region
    $region25: #{unet_block_down_nhwc.2} parent=5 // pred_check
      _
    $region26: #{unet_block_down_nhwc.2} parent=5 // pred_check_branch
      %162 = sbr.rel (%p159) target = $region28
    $region27: #{unet_block_down_nhwc.2} parent=5 // pred_region
      %s163 = ssub.s32 %s11, 1
      %s164 = smul.u32 8, %s16
      %p165 = scmp.lt.s32.totalorder %s164, 15
      %s166 = scalar_select %p165, %s164, 15
      %s167 = smul.addr %s166, 8
      %s168 = scalar_lea.vmem %s0, %s167
      %p169 = pneg %p37
      %p170 = pneg %p34
      %p171 = pneg %p58
      %p172 = pneg %p55
      %p173 = pneg %p84
      %p174 = pneg %p81
      %s175 = smul.u32 8, %s16
      %p176 = scmp.lt.s32.totalorder %s175, 15
      %s177 = scalar_select %p176, %s175, 15
      %s178 = smul.addr %s177, 8
      %s179 = scalar_lea.vmem %s2, %s178
      %p180 = pneg %p105
      %p181 = pneg %p102
      %p182 = pneg %p126
      %p183 = pneg %p123
      %s184 = smul.u32 8, %s16
      %p185 = scmp.lt.s32.totalorder %s184, 15
      %s186 = scalar_select %p185, %s184, 15
      %s187 = smul.addr %s186, 8
      %s188 = scalar_lea.vmem %s0, %s187
      %s189 = smul.u32 8, %s16
      %s190 = smul.u32 8, %s16
      %p191 = scmp.lt.s32.totalorder %s190, 15
      %s192 = scalar_select %p191, %s190, 15
      %s193 = smul.addr %s192, 8
      %s194 = scalar_lea.vmem %s2, %s193
      %s195 = smul.u32 8, %s16
      %p196 = scmp.eq.s32.totalorder %s16, 0
      // Predicated region
      $region29: #{unet_block_down_nhwc.2} parent=27 // pred_check
        %p197 = pneg %p196
      $region30: #{unet_block_down_nhwc.2} parent=27 // pred_check_branch
        %199 = sbr.rel (%p197) target = $region32
      $region31: #{unet_block_down_nhwc.2} parent=27 // pred_region
        %200 = vst [vmem:[%s3] sm:$0x1] 0.0
        %201 = vst [vmem:[%s4] sm:$0x1] 0.0
      $region32: #{unet_block_down_nhwc.2} parent=27 // pred_fallthru
        _
      %v202 = vld [vmem:[%s188] sm:$0xff]
      %v203 = vld [vmem:[%s188 + $0x8] sm:$0xff]
      %v204 = vld [vmem:[%s188 + $0x10] sm:$0xff]
      %v205 = vld [vmem:[%s188 + $0x18] sm:$0xff]
      %v206 = vld [vmem:[%s188 + $0x20] sm:$0xff]
      %v207 = vld [vmem:[%s188 + $0x28] sm:$0xff]
      %v208 = vld [vmem:[%s188 + $0x30] sm:$0xff]
      %v209 = vld [vmem:[%s188 + $0x38] sm:$0xff]
      %v210 = vld [vmem:[%s1] sm:$0xff]
      %v211 = vld [vmem:[%s1 + $0x8] sm:$0xff]
      %v212 = vld [vmem:[%s1 + $0x10] sm:$0xff]
      %v213 = vld [vmem:[%s1 + $0x18] sm:$0xff]
      %v214 = vld [vmem:[%s1 + $0x20] sm:$0xff]
      %v215 = vld [vmem:[%s1 + $0x28] sm:$0xff]
      %v216 = vld [vmem:[%s1 + $0x30] sm:$0xff]
      %v217 = vld [vmem:[%s1 + $0x38] sm:$0xff]
      %vm218 = vcmask 523264
      %v220 = vsel %vm218, %v202, 0
      %v223 = vsel %vm218, %v203, 0
      %v226 = vsel %vm218, %v204, 0
      %v229 = vsel %vm218, %v205, 0
      %v232 = vsel %vm218, %v206, 0
      %v235 = vsel %vm218, %v207, 0
      %v238 = vsel %vm218, %v208, 0
      %v241 = vsel %vm218, %v209, 0
      %243 = vmatprep.subr.mxu0 0.0
      %244 = vmatpush1.msra.mxu0 %v210
      %245 = vmatprep.subr.mxu0 0.0
      %246 = vmatpush1.msra.mxu0 %v211
      %247 = vmatprep.subr.mxu0 0.0
      %248 = vmatpush1.msra.mxu0 %v212
      %249 = vmatprep.subr.mxu0 0.0
      %250 = vmatpush1.msra.mxu0 %v213
      %251 = vmatprep.subr.mxu0 0.0
      %252 = vmatpush1.msra.mxu0 %v214
      %253 = vmatprep.subr.mxu0 0.0
      %254 = vmatpush1.msra.mxu0 %v215
      %255 = vmatprep.subr.mxu0 0.0
      %256 = vmatpush1.msra.mxu0 %v216
      %257 = vmatprep.subr.mxu0 0.0
      %258 = vmatpush1.msra.mxu0 %v217
      %259 = vmatprep.subr.mxu0 0.0
      %260 = vmatpush1.msra.mxu0 0.0
      %261 = vmatprep.subr.mxu0 0.0
      %262 = vmatpush1.msra.mxu0 0.0
      %263 = vmatprep.subr.mxu0 0.0
      %264 = vmatpush1.msra.mxu0 0.0
      %265 = vmatprep.subr.mxu0 0.0
      %266 = vmatpush1.msra.mxu0 0.0
      %267 = vmatprep.subr.mxu0 0.0
      %268 = vmatpush1.msra.mxu0 0.0
      %269 = vmatprep.subr.mxu0 0.0
      %270 = vmatpush1.msra.mxu0 0.0
      %271 = vmatprep.subr.mxu0 0.0
      %272 = vmatpush1.msra.mxu0 0.0
      %273 = vmatprep.subr.mxu0 0.0
      %274 = vmatpush1.msra.mxu0 0.0
      %275 = vmatprep.subr.mxu0 0.0
      %276 = vmatpush1.msra.mxu0 0.0
      %277 = vmatprep.subr.mxu0 0.0
      %278 = vmatpush1.msra.mxu0 0.0
      %279 = vmatprep.subr.mxu0 0.0
      %280 = vmatpush1.msra.mxu0 0.0
      %281 = vmatprep.subr.mxu0 0.0
      %282 = vmatpush1.msra.mxu0 0.0
      %283 = vmatprep.subr.mxu0 0.0
      %284 = vmatpush1.msra.mxu0 0.0
      %285 = vmatprep.subr.mxu0 0.0
      %286 = vmatpush1.msra.mxu0 0.0
      %287 = vmatprep.subr.mxu0 0.0
      %288 = vmatpush1.msra.mxu0 0.0
      %289 = vmatprep.subr.mxu0 0.0
      %290 = vmatpush1.msra.mxu0 0.0
      %291 = vmatprep.subr.mxu0 0.0
      %292 = vmatpush1.msra.mxu0 0.0
      %293 = vmatprep.subr.mxu0 0.0
      %294 = vmatpush1.msra.mxu0 0.0
      %295 = vmatprep.subr.mxu0 0.0
      %296 = vmatpush1.msra.mxu0 0.0
      %297 = vmatprep.subr.mxu0 0.0
      %298 = vmatpush1.msra.mxu0 0.0
      %299 = vmatprep.subr.mxu0 0.0
      %300 = vmatpush1.msra.mxu0 0.0
      %301 = vmatprep.subr.mxu0 0.0
      %302 = vmatpush1.msra.mxu0 0.0
      %303 = vmatprep.subr.mxu0 0.0
      %304 = vmatpush1.msra.mxu0 0.0
      %305 = vmatprep.subr.mxu0 0.0
      %306 = vmatpush1.msra.mxu0 0.0
      %307 = vmatprep.mubr.f32.mxu0 0.0
      %308 = vmatmul.mubr.f32.gmra.mrb[0].mxu0 %v220
      %v309 = vpop.f32.mrb[0].mxu0
      %v310 = vadd.f32 0.0, %v309
      %v311 = vpop.f32.mrb[0].mxu0
      %312 = vmatprep.mubr.f32.mxu0 0.0
      %313 = vmatmul.mubr.f32.gmra.mrb[0].mxu0 %v223
      %v314 = vpop.f32.mrb[0].mxu0
      %v315 = vadd.f32 0.0, %v314
      %v316 = vpop.f32.mrb[0].mxu0
      %317 = vmatprep.mubr.f32.mxu0 0.0
      %318 = vmatmul.mubr.f32.gmra.mrb[0].mxu0 %v226
      %v319 = vpop.f32.mrb[0].mxu0
      %v320 = vadd.f32 0.0, %v319
      %v321 = vpop.f32.mrb[0].mxu0
      %322 = vmatprep.mubr.f32.mxu0 0.0
      %323 = vmatmul.mubr.f32.gmra.mrb[0].mxu0 %v229
      %v324 = vpop.f32.mrb[0].mxu0
      %v325 = vadd.f32 0.0, %v324
      %v326 = vpop.f32.mrb[0].mxu0
      %327 = vmatprep.mubr.f32.mxu0 0.0
      %328 = vmatmul.mubr.f32.gmra.mrb[0].mxu0 %v232
      %v329 = vpop.f32.mrb[0].mxu0
      %v330 = vadd.f32 0.0, %v329
      %v331 = vpop.f32.mrb[0].mxu0
      %332 = vmatprep.mubr.f32.mxu0 0.0
      %333 = vmatmul.mubr.f32.gmra.mrb[0].mxu0 %v235
      %v334 = vpop.f32.mrb[0].mxu0
      %v335 = vadd.f32 0.0, %v334
      %v336 = vpop.f32.mrb[0].mxu0
      %337 = vmatprep.mubr.f32.mxu0 0.0
      %338 = vmatmul.mubr.f32.gmra.mrb[0].mxu0 %v238
      %v339 = vpop.f32.mrb[0].mxu0
      %v340 = vadd.f32 0.0, %v339
      %v341 = vpop.f32.mrb[0].mxu0
      %342 = vmatprep.mubr.f32.mxu0 0.0
      %343 = vmatmul.mubr.f32.gmra.mrb[0].mxu0 %v241
      %v344 = vpop.f32.mrb[0].mxu0
      %v345 = vadd.f32 0.0, %v344
      %v346 = vpop.f32.mrb[0].mxu0
      %347 = vdwg.mxu0
      %348 = vst [vmem:[%s194] sm:$0xff] %v310
      %349 = vst [vmem:[%s194 + $0x8] sm:$0xff] %v315
      %350 = vst [vmem:[%s194 + $0x10] sm:$0xff] %v320
      %351 = vst [vmem:[%s194 + $0x18] sm:$0xff] %v325
      %352 = vst [vmem:[%s194 + $0x20] sm:$0xff] %v330
      %353 = vst [vmem:[%s194 + $0x28] sm:$0xff] %v335
      %354 = vst [vmem:[%s194 + $0x30] sm:$0xff] %v340
      %355 = vst [vmem:[%s194 + $0x38] sm:$0xff] %v345
      %v356 = vld [vmem:[%s3] sm:$0x1]
      %v357 = vadd.f32 %v310, %v315
      %v358 = vadd.f32 %v357, %v320
      %v359 = vadd.f32 %v358, %v325
      %v360 = vadd.f32 %v359, %v330
      %v361 = vadd.f32 %v360, %v335
      %v362 = vadd.f32 %v361, %v340
      %v363 = vadd.f32 %v362, %v345
      %v364 = vrot.slane %v363, 4
      %v365 = vadd.f32 %v363, %v364
      %v366 = vrot.slane %v365, 2
      %v367 = vadd.f32 %v365, %v366
      %v368 = vrot.slane %v367, 1
      %v369 = vadd.f32 %v367, %v368
      %v370 = vadd.f32 %v356, %v369
      %371 = vst [vmem:[%s3] sm:$0x1] %v370
      %v372 = vld [vmem:[%s4] sm:$0x1]
      %v373 = vmul.f32 %v310, %v310
      %v374 = vmul.f32 %v315, %v315
      %v375 = vmul.f32 %v320, %v320
      %v376 = vmul.f32 %v325, %v325
      %v377 = vmul.f32 %v330, %v330
      %v378 = vmul.f32 %v335, %v335
      %v379 = vmul.f32 %v340, %v340
      %v380 = vmul.f32 %v345, %v345
      %v381 = vadd.f32 %v373, %v374
      %v382 = vadd.f32 %v381, %v375
      %v383 = vadd.f32 %v382, %v376
      %v384 = vadd.f32 %v383, %v377
      %v385 = vadd.f32 %v384, %v378
      %v386 = vadd.f32 %v385, %v379
      %v387 = vadd.f32 %v386, %v380
      %v388 = vrot.slane %v387, 4
      %v389 = vadd.f32 %v387, %v388
      %v390 = vrot.slane %v389, 2
      %v391 = vadd.f32 %v389, %v390
      %v392 = vrot.slane %v391, 1
      %v393 = vadd.f32 %v391, %v392
      %v394 = vadd.f32 %v372, %v393
      %395 = vst [vmem:[%s4] sm:$0x1] %v394
      %s396 = smul.u32 8, %s16
      %p397 = scmp.lt.s32.totalorder %s396, 15
      %s398 = scalar_select %p397, %s396, 15
      %s399 = smul.addr %s398, 8
      %s400 = scalar_lea.vmem %s2, %s399
      // Predicated region
      $region33: #{unet_block_down_nhwc.2} parent=27 // pred_check
        %p401 = pneg %p81
      $region34: #{unet_block_down_nhwc.2} parent=27 // pred_check_branch
        %403 = sbr.rel (%p401) target = $region36
      $region35: #{unet_block_down_nhwc.2} parent=27 // pred_region
        %s404 = smul.u32 8, %s16
      $region36: #{unet_block_down_nhwc.2} parent=27 // pred_fallthru
        _
      // Predicated region
      $region37: #{unet_block_down_nhwc.2} parent=27 // pred_check
        %p405 = pneg %p102
      $region38: #{unet_block_down_nhwc.2} parent=27 // pred_check_branch
        %407 = sbr.rel (%p405) target = $region40
      $region39: #{unet_block_down_nhwc.2} parent=27 // pred_region
        _
      $region40: #{unet_block_down_nhwc.2} parent=27 // pred_fallthru
        _
      // Predicated region
      $region41: #{unet_block_down_nhwc.2} parent=27 // pred_check
        %p408 = pneg %p123
      $region42: #{unet_block_down_nhwc.2} parent=27 // pred_check_branch
        %410 = sbr.rel (%p408) target = $region44
      $region43: #{unet_block_down_nhwc.2} parent=27 // pred_region
        _
      $region44: #{unet_block_down_nhwc.2} parent=27 // pred_fallthru
        _
      // Predicated region
      $region45: #{unet_block_down_nhwc.2} parent=27 // pred_check
        %p411 = pneg %p102
      $region46: #{unet_block_down_nhwc.2} parent=27 // pred_check_branch
        %413 = sbr.rel (%p411) target = $region48
      $region47: #{unet_block_down_nhwc.2} parent=27 // pred_region
        _
      $region48: #{unet_block_down_nhwc.2} parent=27 // pred_fallthru
        _
      // Predicated region
      $region49: #{unet_block_down_nhwc.2} parent=27 // pred_check
        %p414 = pneg %p123
      $region50: #{unet_block_down_nhwc.2} parent=27 // pred_check_branch
        %416 = sbr.rel (%p414) target = $region52
      $region51: #{unet_block_down_nhwc.2} parent=27 // pred_region
        _
      $region52: #{unet_block_down_nhwc.2} parent=27 // pred_fallthru
        _
    $region28: #{unet_block_down_nhwc.2} parent=5 // pred_fallthru
      _
    %p417 = scmp.le.s32.totalorder 2, %s11
    // Predicated region
    $region53: #{unet_block_down_nhwc.2} parent=5 // pred_check
      %p418 = pneg %p417
    $region54: #{unet_block_down_nhwc.2} parent=5 // pred_check_branch
      %420 = sbr.rel (%p418) target = $region56
    $region55: #{unet_block_down_nhwc.2} parent=5 // pred_region
      %s421 = ssub.s32 %s11, 2
      // Predicated region
      $region57: #{unet_block_down_nhwc.2} parent=55 // pred_check
        %p422 = pneg %p87
      $region58: #{unet_block_down_nhwc.2} parent=55 // pred_check_branch
        %424 = sbr.rel (%p422) target = $region60
      $region59: #{unet_block_down_nhwc.2} parent=55 // pred_region
        %s425 = smul.u32 8, %s17
        %p426 = scmp.lt.s32.totalorder %s425, 15
        %s427 = scalar_select %p426, %s425, 15
        %s428 = smul.addr %s427, 8
        %s429 = scalar_lea.vmem %s2, %s428
      $region60: #{unet_block_down_nhwc.2} parent=55 // pred_fallthru
        _
    $region56: #{unet_block_down_nhwc.2} parent=5 // pred_fallthru
      _
  $region6: #{unet_block_down_nhwc.2} parent=0 // loop_footer
    %s15 = sadd.s32 1, %s11
  $region7: #{unet_block_down_nhwc.2} parent=0 // loop_footer_branch
    %10 = sbr.rel target = $region3
  $region8: #{unet_block_down_nhwc.2} parent=0 // loop_exit
    _

</llo_original>
